<compile_context>
chip_gen: v5e
topology: v5e:2x2
jax: 0.10.0
libtpu: 0.0.40
codegen_flags: <defaults>
</compile_context>

<pallas_src>
import functools

import jax
import jax.numpy as jnp
from jax.experimental import pallas as pl
from jax.experimental.pallas import tpu as pltpu


def _cdiv(a, b):
    return (a + b - 1) // b


def _round_up(x, m):
    return ((x + m - 1) // m) * m


def dqn_kernel(h_ref, w1_ref, b1_ref, w2_ref, b2_ref, o_ref, acc_ref, *,
               seq_len, ts):
    """One (batch-tile, seq-chunk) grid step.

    h_ref : (TB, TS, H) bf16 encoder hidden-state chunk (streamed)
    w1_ref: (H,  Hp)    bf16 fc1 weight (in, out), VMEM-resident
    b1_ref: (1,  Hp)    f32  fc1 bias
    w2_ref: (Hp, Ap)    bf16 fc2 weight (in, out), VMEM-resident
    b2_ref: (1,  Ap)    f32  fc2 bias
    o_ref : (TB, Ap)    f32  Q-values tile (lane-dense), written at last chunk
    acc_ref:(TB, H)     f32  running sum over the sequence axis
    """
    s = pl.program_id(1)

    @pl.when(s == 0)
    def _():
        acc_ref[...] = jnp.zeros_like(acc_ref)

    chunk = h_ref[...]                                       # (TB, TS, H) bf16
    if seq_len % ts != 0:
        # Ragged final seq chunk: zero out the out-of-bounds rows before summing.
        valid = seq_len - s * ts
        pos = jax.lax.broadcasted_iota(jnp.int32, chunk.shape, 1)
        chunk = jnp.where(pos < valid, chunk, jnp.zeros_like(chunk))
    # Per-chunk f32 accumulation (bounded live f32, exact reduction).
    acc_ref[...] += jnp.sum(chunk.astype(jnp.float32), axis=1)   # (TB, H)

    @pl.when(s == pl.num_programs(1) - 1)
    def _():
        x = acc_ref[...] * (1.0 / seq_len)                   # mean, f32 (TB, H)
        # fc1: bf16 MXU operands, f32 accumulation; bias + ReLU stay f32.
        z1 = jnp.dot(x.astype(jnp.bfloat16), w1_ref[...],
                     preferred_element_type=jnp.float32) + b1_ref[...]
        a1 = jnp.maximum(z1, 0.0)
        # fc2
        z2 = jnp.dot(a1.astype(jnp.bfloat16), w2_ref[...],
                     preferred_element_type=jnp.float32) + b2_ref[...]
        o_ref[...] = z2.astype(o_ref.dtype)


def prepare_dqn_params(w1, b1, w2, b2):
    """One-time parameter prep (out of the per-call hot path).

    PyTorch-layout weights (out, in) are transposed to (in, out) and cast to
    bf16.  Only the *output* dims are padded to multiples of 128 (lane-dense
    stores / fc2 contraction); the fc1 input dim stays at the true H so the big
    activation tensor never needs padding.  Zero padding is exact.
    """
    H = w1.shape[1]
    A = w2.shape[0]
    Hp = _round_up(H, 128)     # fc1 output / fc2 input (padded rows are zero)
    Ap = _round_up(A, 128)     # fc2 output (lane-dense store)

    w1_t = jnp.zeros((H, Hp), jnp.bfloat16).at[:, :H].set(w1.T.astype(jnp.bfloat16))
    w2_t = jnp.zeros((Hp, Ap), jnp.bfloat16).at[:H, :A].set(w2.T.astype(jnp.bfloat16))
    b1_p = jnp.zeros((1, Hp), jnp.float32).at[0, :H].set(b1.astype(jnp.float32))
    b2_p = jnp.zeros((1, Ap), jnp.float32).at[0, :A].set(b2.astype(jnp.float32))
    return (w1_t, b1_p, w2_t, b2_p)


def _batch_tile(B):
    """Batch tile: full-width for tiny B, otherwise balanced multiples of 8."""
    cap = 128
    try:
        kind = jax.devices()[0].device_kind.lower()
        if "v5" not in kind:      # v6e / v7x MXU is 256 wide
            cap = 256
    except Exception:
        pass
    if B <= 8:
        return B                  # block dim == full array dim: no padding at all
    n_tiles = _cdiv(B, cap)
    return min(cap, _round_up(_cdiv(B, n_tiles), 8))


@functools.partial(jax.jit, static_argnames=("action_size", "single_buffer_weights"))
def _dqn_forward_impl(hidden_states, params, *, action_size, single_buffer_weights):
    w1_t, b1_p, w2_t, b2_p = params
    B, S, H = hidden_states.shape
    Hp = w1_t.shape[1]
    Ap = w2_t.shape[1]
    A = action_size

    # Cast only -- no padded copy of the (B, S, H) activations.
    h = hidden_states.astype(jnp.bfloat16)

    TB = _batch_tile(B)
    NB = _cdiv(B, TB)

    # Stream the sequence axis so the double-buffered bf16 h chunk stays within
    # an explicit per-buffer VMEM budget (v7x: 64 MiB physical / 32 MiB scoped).
    per_buf_budget = 8 * 1024 * 1024
    ts_fit = max(8, (per_buf_budget // max(1, TB * H * 2)) // 8 * 8)
    TS = S if ts_fit >= S else ts_fit
    NS = _cdiv(S, TS)

    kernel = functools.partial(dqn_kernel, seq_len=S, ts=TS)

    def _resident(shape):
        # Grid-invariant operand: constant index_map; single-buffer when supported.
        idx = lambda b, s: (0,) * len(shape)
        if single_buffer_weights and hasattr(pl, "Buffered"):
            try:
                return pl.BlockSpec(shape, idx, pipeline_mode=pl.Buffered(1))
            except TypeError:
                pass
        return pl.BlockSpec(shape, idx)

    out = pl.pallas_call(
        kernel,
        out_shape=jax.ShapeDtypeStruct((B, Ap), jnp.float32),
        grid_spec=pltpu.PrefetchScalarGridSpec(
            num_scalar_prefetch=0,
            grid=(NB, NS),                        # batch parallel, seq reduction last
            in_specs=[
                pl.BlockSpec((TB, TS, H), lambda b, s: (b, s, 0)),  # streamed h chunk
                _resident((H, Hp)),               # fc1 weight (VMEM-resident)
                _resident((1, Hp)),               # fc1 bias
                _resident((Hp, Ap)),              # fc2 weight (VMEM-resident)
                _resident((1, Ap)),               # fc2 bias
            ],
            out_specs=pl.BlockSpec((TB, Ap), lambda b, s: (b, 0)),  # lane-dense
            scratch_shapes=[pltpu.VMEM((TB, H), jnp.float32)],      # seq-sum acc
        ),
        compiler_params=pltpu.CompilerParams(
            dimension_semantics=("parallel", "arbitrary"),
            vmem_limit_bytes=48 * 1024 * 1024,
        ),
    )(h, w1_t, b1_p, w2_t, b2_p)

    # Slice off the lane padding of the action dim (and any ragged batch rows
    # never exist in out_shape: OOB output writes were dropped by Pallas).
    return out[:, :A]


def dqn_forward(hidden_states, params, action_size):
    """hidden_states: (B, S, H) float; params from prepare_dqn_params()."""
    try:
        out = _dqn_forward_impl(hidden_states, params, action_size=action_size,
                                single_buffer_weights=True)
        return jax.block_until_ready(out)
    except Exception:
        # Fallback for JAX builds without BlockSpec(pipeline_mode=pl.Buffered(1)).
        out = _dqn_forward_impl(hidden_states, params, action_size=action_size,
                                single_buffer_weights=False)
        return jax.block_until_ready(out)


def synthetic_encoder(input_ids, embed_table):
    # TODO(synk): the real module uses an external pre-trained `encoder_model`;
    # here it is replaced by a deterministic embedding lookup producing
    # last_hidden_state of shape (B, S, H).
    return jnp.take(embed_table, input_ids, axis=0)   # (B, S, H)


if __name__ == "__main__":
    # Small, deterministic shapes.
    B, S, H, A, VOCAB = 2, 8, 32, 16, 64   # batch, seq, hidden, action, vocab

    key = jax.random.PRNGKey(0)
    k_ids, k_emb, k_w1, k_b1, k_w2, k_b2 = jax.random.split(key, 6)

    input_ids = jax.random.randint(k_ids, (B, S), 0, VOCAB, dtype=jnp.int32)
    embed_table = jax.random.normal(k_emb, (VOCAB, H), dtype=jnp.float32) * 0.02

    # nn.Linear-style init: uniform(-1/sqrt(in), 1/sqrt(in)), weight shape (out, in).
    bound1 = 1.0 / (H ** 0.5)
    w1 = jax.random.uniform(k_w1, (H, H), jnp.float32, -bound1, bound1)
    b1 = jax.random.uniform(k_b1, (H,), jnp.float32, -bound1, bound1)
    w2 = jax.random.uniform(k_w2, (A, H), jnp.float32, -bound1, bound1)
    b2 = jax.random.uniform(k_b2, (H,) if False else (A,), jnp.float32, -bound1, bound1)

    # Encoder lookup in plain JAX, hot path in the Pallas kernel.
    hidden_states = synthetic_encoder(input_ids, embed_table)      # (B, S, H)

    # One-time parameter prep (transpose/pad/cast) outside the inference loop.
    params = prepare_dqn_params(w1, b1, w2, b2)

    q_values = dqn_forward(hidden_states, params, action_size=A)   # (B, A)
    q_values = jax.block_until_ready(q_values)

    # Pure-f32 JAX reference check (tolerance loosened for bf16 storage/matmuls).
    x_ref = hidden_states.mean(axis=1)
    ref = jnp.maximum(x_ref @ w1.T + b1, 0.0) @ w2.T + b2
    assert q_values.shape == (B, A)
    assert jnp.allclose(q_values, ref, atol=1e-2, rtol=1e-2), (
        float(jnp.max(jnp.abs(q_values - ref))))

    print("KERNEL_OK")
</pallas_src>

<mosaic_0001>
module attributes {stable_mosaic.version = 11 : i64} {
  func.func @dqn_kernel(%arg0: i32, %arg1: i32, %arg2: memref<2x8x32xbf16, #tpu.memory_space<vmem>>, %arg3: memref<32x128xbf16, #tpu.memory_space<vmem>>, %arg4: memref<1x128xf32, #tpu.memory_space<vmem>>, %arg5: memref<128x128xbf16, #tpu.memory_space<vmem>>, %arg6: memref<1x128xf32, #tpu.memory_space<vmem>>, %arg7: memref<2x128xf32, #tpu.memory_space<vmem>>, %arg8: memref<2x32xf32, #tpu.memory_space<vmem>>) attributes {dimension_semantics = [#tpu.dimension_semantics<parallel>, #tpu.dimension_semantics<arbitrary>], iteration_bounds = array<i64: 1, 1>, scalar_prefetch = 0 : i64, scratch_operands = 1 : i64, tpu.core_type = #tpu.core_type<tc>, window_params = [{transform_indices = @transform_0, window_bounds = array<i64: 2, 8, 32>}, {pipeline_mode = #tpu.pipeline_mode<synchronous>, transform_indices = @transform_1, window_bounds = array<i64: 32, 128>}, {pipeline_mode = #tpu.pipeline_mode<synchronous>, transform_indices = @transform_2, window_bounds = array<i64: 1, 128>}, {pipeline_mode = #tpu.pipeline_mode<synchronous>, transform_indices = @transform_3, window_bounds = array<i64: 128, 128>}, {pipeline_mode = #tpu.pipeline_mode<synchronous>, transform_indices = @transform_4, window_bounds = array<i64: 1, 128>}, {transform_indices = @transform_5, window_bounds = array<i64: 2, 128>}]} {
    %c0_i32 = arith.constant 0 : i32
    %0 = arith.cmpi eq, %arg1, %c0_i32 : i32
    %1 = arith.extui %0 : i1 to i32
    %c0_i32_0 = arith.constant 0 : i32
    %2 = arith.cmpi ne, %1, %c0_i32_0 : i32
    scf.if %2 {
      %cst_9 = arith.constant 0.000000e+00 : f32
      %12 = vector.broadcast %cst_9 : f32 to vector<2x32xf32>
      %c0_10 = arith.constant 0 : index
      %c0_11 = arith.constant 0 : index
      %13 = vector.load %arg8[%c0_10, %c0_11] : memref<2x32xf32, #tpu.memory_space<vmem>>, vector<2x32xf32>
      tpu.vector_store %arg8[%c0_10, %c0_11], %12 {strides = array<i32>} : memref<2x32xf32, #tpu.memory_space<vmem>>, vector<2x32xf32>,
    } else {
    }
    %c0 = arith.constant 0 : index
    %c0_1 = arith.constant 0 : index
    %c0_2 = arith.constant 0 : index
    %3 = vector.load %arg2[%c0, %c0_1, %c0_2] : memref<2x8x32xbf16, #tpu.memory_space<vmem>>, vector<2x8x32xbf16>
    %c0_3 = arith.constant 0 : index
    %c0_4 = arith.constant 0 : index
    %4 = vector.load %arg8[%c0_3, %c0_4] : memref<2x32xf32, #tpu.memory_space<vmem>>, vector<2x32xf32>
    %5 = arith.extf %3 : vector<2x8x32xbf16> to vector<2x8x32xf32>
    %cst = arith.constant dense<0.000000e+00> : vector<2x32xf32>
    %6 = vector.multi_reduction <add>, %5, %cst [1] : vector<2x8x32xf32> to vector<2x32xf32>
    %7 = arith.addf %4, %6 : vector<2x32xf32>
    %c0_5 = arith.constant 0 : index
    %c0_6 = arith.constant 0 : index
    %8 = vector.load %arg8[%c0_5, %c0_6] : memref<2x32xf32, #tpu.memory_space<vmem>>, vector<2x32xf32>
    tpu.vector_store %arg8[%c0_5, %c0_6], %7 {strides = array<i32>} : memref<2x32xf32, #tpu.memory_space<vmem>>, vector<2x32xf32>,
    %c0_i32_7 = arith.constant 0 : i32
    %9 = arith.cmpi eq, %arg1, %c0_i32_7 : i32
    %10 = arith.extui %9 : i1 to i32
    %c0_i32_8 = arith.constant 0 : i32
    %11 = arith.cmpi ne, %10, %c0_i32_8 : i32
    scf.if %11 {
      %c0_9 = arith.constant 0 : index
      %c0_10 = arith.constant 0 : index
      %12 = vector.load %arg8[%c0_9, %c0_10] : memref<2x32xf32, #tpu.memory_space<vmem>>, vector<2x32xf32>
      %cst_11 = arith.constant 1.250000e-01 : f32
      %13 = vector.broadcast %cst_11 : f32 to vector<2x32xf32>
      %14 = arith.mulf %12, %13 : vector<2x32xf32>
      %15 = arith.truncf %14 : vector<2x32xf32> to vector<2x32xbf16>
      %c0_12 = arith.constant 0 : index
      %c0_13 = arith.constant 0 : index
      %16 = vector.load %arg3[%c0_12, %c0_13] : memref<32x128xbf16, #tpu.memory_space<vmem>>, vector<32x128xbf16>
      %cst_14 = arith.constant dense<0.000000e+00> : vector<2x128xf32>
      %17 = tpu.matmul %15, %16, %cst_14 {dimension_numbers = #tpu.dot_dimension_numbers<[1], [0], [0], [1], [0, 0, 1, 1], [], []>} : vector<2x32xbf16>, vector<32x128xbf16>, vector<2x128xf32> -> vector<2x128xf32>
      %c0_15 = arith.constant 0 : index
      %c0_16 = arith.constant 0 : index
      %18 = vector.load %arg4[%c0_15, %c0_16] : memref<1x128xf32, #tpu.memory_space<vmem>>, vector<1x128xf32>
      %19 = vector.broadcast %18 : vector<1x128xf32> to vector<2x128xf32>
      %20 = arith.addf %17, %19 : vector<2x128xf32>
      %cst_17 = arith.constant 0.000000e+00 : f32
      %21 = vector.broadcast %cst_17 : f32 to vector<2x128xf32>
      %22 = arith.maximumf %20, %21 : vector<2x128xf32>
      %23 = arith.truncf %22 : vector<2x128xf32> to vector<2x128xbf16>
      %c0_18 = arith.constant 0 : index
      %c0_19 = arith.constant 0 : index
      %24 = vector.load %arg5[%c0_18, %c0_19] : memref<128x128xbf16, #tpu.memory_space<vmem>>, vector<128x128xbf16>
      %cst_20 = arith.constant dense<0.000000e+00> : vector<2x128xf32>
      %25 = tpu.matmul %23, %24, %cst_20 {dimension_numbers = #tpu.dot_dimension_numbers<[1], [0], [0], [1], [0, 0, 1, 1], [], []>} : vector<2x128xbf16>, vector<128x128xbf16>, vector<2x128xf32> -> vector<2x128xf32>
      %c0_21 = arith.constant 0 : index
      %c0_22 = arith.constant 0 : index
      %26 = vector.load %arg6[%c0_21, %c0_22] : memref<1x128xf32, #tpu.memory_space<vmem>>, vector<1x128xf32>
      %27 = vector.broadcast %26 : vector<1x128xf32> to vector<2x128xf32>
      %28 = arith.addf %25, %27 : vector<2x128xf32>
      %c0_23 = arith.constant 0 : index
      %c0_24 = arith.constant 0 : index
      %29 = vector.load %arg7[%c0_23, %c0_24] : memref<2x128xf32, #tpu.memory_space<vmem>>, vector<2x128xf32>
      tpu.vector_store %arg7[%c0_23, %c0_24], %28 {strides = array<i32>} : memref<2x128xf32, #tpu.memory_space<vmem>>, vector<2x128xf32>,
    } else {
    }
    return
  }
  func.func @transform_0(%arg0: i32, %arg1: i32) -> (i32, i32, i32) {
    %c0_i32 = arith.constant 0 : i32
    %c0_i32_0 = arith.constant 0 : i32
    return %arg0, %arg1, %c0_i32 : i32, i32, i32
  }
  func.func @transform_1(%arg0: i32, %arg1: i32) -> (i32, i32) {
    %c0_i32 = arith.constant 0 : i32
    %c0_i32_0 = arith.constant 0 : i32
    %c0_i32_1 = arith.constant 0 : i32
    return %c0_i32, %c0_i32_0 : i32, i32
  }
  func.func @transform_2(%arg0: i32, %arg1: i32) -> (i32, i32) {
    %c0_i32 = arith.constant 0 : i32
    %c0_i32_0 = arith.constant 0 : i32
    %c0_i32_1 = arith.constant 0 : i32
    return %c0_i32, %c0_i32_0 : i32, i32
  }
  func.func @transform_3(%arg0: i32, %arg1: i32) -> (i32, i32) {
    %c0_i32 = arith.constant 0 : i32
    %c0_i32_0 = arith.constant 0 : i32
    %c0_i32_1 = arith.constant 0 : i32
    return %c0_i32, %c0_i32_0 : i32, i32
  }
  func.func @transform_4(%arg0: i32, %arg1: i32) -> (i32, i32) {
    %c0_i32 = arith.constant 0 : i32
    %c0_i32_0 = arith.constant 0 : i32
    %c0_i32_1 = arith.constant 0 : i32
    return %c0_i32, %c0_i32_0 : i32, i32
  }
  func.func @transform_5(%arg0: i32, %arg1: i32) -> (i32, i32) {
    %c0_i32 = arith.constant 0 : i32
    %c0_i32_0 = arith.constant 0 : i32
    return %arg0, %c0_i32 : i32, i32
  }
}

module attributes {stable_mosaic.version = 11 : i64} {
  func.func @dqn_kernel(%arg0: i32, %arg1: i32, %arg2: memref<2x8x32xbf16, #tpu.memory_space<vmem>>, %arg3: memref<32x128xbf16, #tpu.memory_space<vmem>>, %arg4: memref<1x128xf32, #tpu.memory_space<vmem>>, %arg5: memref<128x128xbf16, #tpu.memory_space<vmem>>, %arg6: memref<1x128xf32, #tpu.memory_space<vmem>>, %arg7: memref<2x128xf32, #tpu.memory_space<vmem>>, %arg8: memref<2x32xf32, #tpu.memory_space<vmem>>) attributes {dimension_semantics = [#tpu.dimension_semantics<parallel>, #tpu.dimension_semantics<arbitrary>], iteration_bounds = array<i64: 1, 1>, scalar_prefetch = 0 : i64, scratch_operands = 1 : i64, tpu.core_type = #tpu.core_type<tc>, window_params = [{transform_indices = @transform_0, window_bounds = array<i64: 2, 8, 32>}, {pipeline_mode = #tpu.pipeline_mode<synchronous>, transform_indices = @transform_1, window_bounds = array<i64: 32, 128>}, {pipeline_mode = #tpu.pipeline_mode<synchronous>, transform_indices = @transform_2, window_bounds = array<i64: 1, 128>}, {pipeline_mode = #tpu.pipeline_mode<synchronous>, transform_indices = @transform_3, window_bounds = array<i64: 128, 128>}, {pipeline_mode = #tpu.pipeline_mode<synchronous>, transform_indices = @transform_4, window_bounds = array<i64: 1, 128>}, {transform_indices = @transform_5, window_bounds = array<i64: 2, 128>}]} {
    %c0_i32 = arith.constant 0 : i32
    %0 = arith.cmpi eq, %arg1, %c0_i32 : i32
    %1 = arith.extui %0 : i1 to i32
    %c0_i32_0 = arith.constant 0 : i32
    %2 = arith.cmpi ne, %1, %c0_i32_0 : i32
    scf.if %2 {
      %cst_9 = arith.constant 0.000000e+00 : f32
      %12 = vector.broadcast %cst_9 : f32 to vector<2x32xf32>
      %c0_10 = arith.constant 0 : index
      %c0_11 = arith.constant 0 : index
      %13 = vector.load %arg8[%c0_10, %c0_11] : memref<2x32xf32, #tpu.memory_space<vmem>>, vector<2x32xf32>
      tpu.vector_store %arg8[%c0_10, %c0_11], %12 {strides = array<i32>} : memref<2x32xf32, #tpu.memory_space<vmem>>, vector<2x32xf32>,
    } else {
    }
    %c0 = arith.constant 0 : index
    %c0_1 = arith.constant 0 : index
    %c0_2 = arith.constant 0 : index
    %3 = vector.load %arg2[%c0, %c0_1, %c0_2] : memref<2x8x32xbf16, #tpu.memory_space<vmem>>, vector<2x8x32xbf16>
    %c0_3 = arith.constant 0 : index
    %c0_4 = arith.constant 0 : index
    %4 = vector.load %arg8[%c0_3, %c0_4] : memref<2x32xf32, #tpu.memory_space<vmem>>, vector<2x32xf32>
    %5 = arith.extf %3 : vector<2x8x32xbf16> to vector<2x8x32xf32>
    %cst = arith.constant dense<0.000000e+00> : vector<2x32xf32>
    %6 = vector.multi_reduction <add>, %5, %cst [1] : vector<2x8x32xf32> to vector<2x32xf32>
    %7 = arith.addf %4, %6 : vector<2x32xf32>
    %c0_5 = arith.constant 0 : index
    %c0_6 = arith.constant 0 : index
    %8 = vector.load %arg8[%c0_5, %c0_6] : memref<2x32xf32, #tpu.memory_space<vmem>>, vector<2x32xf32>
    tpu.vector_store %arg8[%c0_5, %c0_6], %7 {strides = array<i32>} : memref<2x32xf32, #tpu.memory_space<vmem>>, vector<2x32xf32>,
    %c0_i32_7 = arith.constant 0 : i32
    %9 = arith.cmpi eq, %arg1, %c0_i32_7 : i32
    %10 = arith.extui %9 : i1 to i32
    %c0_i32_8 = arith.constant 0 : i32
    %11 = arith.cmpi ne, %10, %c0_i32_8 : i32
    scf.if %11 {
      %c0_9 = arith.constant 0 : index
      %c0_10 = arith.constant 0 : index
      %12 = vector.load %arg8[%c0_9, %c0_10] : memref<2x32xf32, #tpu.memory_space<vmem>>, vector<2x32xf32>
      %cst_11 = arith.constant 1.250000e-01 : f32
      %13 = vector.broadcast %cst_11 : f32 to vector<2x32xf32>
      %14 = arith.mulf %12, %13 : vector<2x32xf32>
      %15 = arith.truncf %14 : vector<2x32xf32> to vector<2x32xbf16>
      %c0_12 = arith.constant 0 : index
      %c0_13 = arith.constant 0 : index
      %16 = vector.load %arg3[%c0_12, %c0_13] : memref<32x128xbf16, #tpu.memory_space<vmem>>, vector<32x128xbf16>
      %cst_14 = arith.constant dense<0.000000e+00> : vector<2x128xf32>
      %17 = tpu.matmul %15, %16, %cst_14 {dimension_numbers = #tpu.dot_dimension_numbers<[1], [0], [0], [1], [0, 0, 1, 1], [], []>} : vector<2x32xbf16>, vector<32x128xbf16>, vector<2x128xf32> -> vector<2x128xf32>
      %c0_15 = arith.constant 0 : index
      %c0_16 = arith.constant 0 : index
      %18 = vector.load %arg4[%c0_15, %c0_16] : memref<1x128xf32, #tpu.memory_space<vmem>>, vector<1x128xf32>
      %19 = vector.broadcast %18 : vector<1x128xf32> to vector<2x128xf32>
      %20 = arith.addf %17, %19 : vector<2x128xf32>
      %cst_17 = arith.constant 0.000000e+00 : f32
      %21 = vector.broadcast %cst_17 : f32 to vector<2x128xf32>
      %22 = arith.maximumf %20, %21 : vector<2x128xf32>
      %23 = arith.truncf %22 : vector<2x128xf32> to vector<2x128xbf16>
      %c0_18 = arith.constant 0 : index
      %c0_19 = arith.constant 0 : index
      %24 = vector.load %arg5[%c0_18, %c0_19] : memref<128x128xbf16, #tpu.memory_space<vmem>>, vector<128x128xbf16>
      %cst_20 = arith.constant dense<0.000000e+00> : vector<2x128xf32>
      %25 = tpu.matmul %23, %24, %cst_20 {dimension_numbers = #tpu.dot_dimension_numbers<[1], [0], [0], [1], [0, 0, 1, 1], [], []>} : vector<2x128xbf16>, vector<128x128xbf16>, vector<2x128xf32> -> vector<2x128xf32>
      %c0_21 = arith.constant 0 : index
      %c0_22 = arith.constant 0 : index
      %26 = vector.load %arg6[%c0_21, %c0_22] : memref<1x128xf32, #tpu.memory_space<vmem>>, vector<1x128xf32>
      %27 = vector.broadcast %26 : vector<1x128xf32> to vector<2x128xf32>
      %28 = arith.addf %25, %27 : vector<2x128xf32>
      %c0_23 = arith.constant 0 : index
      %c0_24 = arith.constant 0 : index
      %29 = vector.load %arg7[%c0_23, %c0_24] : memref<2x128xf32, #tpu.memory_space<vmem>>, vector<2x128xf32>
      tpu.vector_store %arg7[%c0_23, %c0_24], %28 {strides = array<i32>} : memref<2x128xf32, #tpu.memory_space<vmem>>, vector<2x128xf32>,
    } else {
    }
    return
  }
  func.func @transform_0(%arg0: i32, %arg1: i32) -> (i32, i32, i32) {
    %c0_i32 = arith.constant 0 : i32
    %c0_i32_0 = arith.constant 0 : i32
    return %arg0, %arg1, %c0_i32 : i32, i32, i32
  }
  func.func @transform_1(%arg0: i32, %arg1: i32) -> (i32, i32) {
    %c0_i32 = arith.constant 0 : i32
    %c0_i32_0 = arith.constant 0 : i32
    %c0_i32_1 = arith.constant 0 : i32
    return %c0_i32, %c0_i32_0 : i32, i32
  }
  func.func @transform_2(%arg0: i32, %arg1: i32) -> (i32, i32) {
    %c0_i32 = arith.constant 0 : i32
    %c0_i32_0 = arith.constant 0 : i32
    %c0_i32_1 = arith.constant 0 : i32
    return %c0_i32, %c0_i32_0 : i32, i32
  }
  func.func @transform_3(%arg0: i32, %arg1: i32) -> (i32, i32) {
    %c0_i32 = arith.constant 0 : i32
    %c0_i32_0 = arith.constant 0 : i32
    %c0_i32_1 = arith.constant 0 : i32
    return %c0_i32, %c0_i32_0 : i32, i32
  }
  func.func @transform_4(%arg0: i32, %arg1: i32) -> (i32, i32) {
    %c0_i32 = arith.constant 0 : i32
    %c0_i32_0 = arith.constant 0 : i32
    %c0_i32_1 = arith.constant 0 : i32
    return %c0_i32, %c0_i32_0 : i32, i32
  }
  func.func @transform_5(%arg0: i32, %arg1: i32) -> (i32, i32) {
    %c0_i32 = arith.constant 0 : i32
    %c0_i32_0 = arith.constant 0 : i32
    return %arg0, %c0_i32 : i32, i32
  }
}

</mosaic_0001>

<llo_original>
// kernel: _dqn_forward_impl.1
$region0: #{_dqn_forward_impl.1}
  #allocation0 [shape = 'u32[]', space=smem, size = 0x4, offset = 0x4, fixed_abs, tag = 'smem constant byte address 0x4 - core index']
  #allocation1 [shape = 'u32[72,128]{1,0:T(1,128)}', space=vmem, size = 0x9000, scoped, tag = 'internal scratch']
  #allocation2 [shape = 'f32[2,32]{1,0:T(2,128)}', space=vmem, size = 0x400, scoped, tag = 'scratch operand']
  %s0 = inlined_call_operand.vmem [shape: bf16[2,8,32], index: 0, kind: input, shape index: {}]
  %s1 = inlined_call_operand.vmem [shape: bf16[32,128], index: 1, kind: input, shape index: {}]
  %s2 = inlined_call_operand.vmem [shape: f32[1,128], index: 2, kind: input, shape index: {}]
  %s3 = inlined_call_operand.hbm [shape: bf16[128,128], index: 3, kind: input, shape index: {}]
  %s4 = inlined_call_operand.vmem [shape: f32[1,128], index: 4, kind: input, shape index: {}]
  %s5 = inlined_call_operand.hbm [shape: f32[2,128], index: 5, kind: output, shape index: {}]
  %s6 = sld [smem:[#allocation0]]
  $region42: #{_dqn_forward_impl.1} parent=0
    _
  %s8 = ssub.s32 1, %s6
  %s9 = scalar_select 0, %s8, %s6
  $region1: #{_dqn_forward_impl.1} parent=0
    #allocation3 [shape = 'u8[32768]{0}', space=vmem, size = 0x8000, scoped, tag = 'input window, operand 3, single buffered']
    #allocation4 [shape = 's32[1]{0}', space=sflag, size = 0x4, scoped, tag = 'scoped memory for _dqn_forward_impl.1']
    #allocation5 [shape = 's32[1]{0}', space=sflag, size = 0x4, scoped, tag = 'scoped memory for _dqn_forward_impl.1']
    #allocation6 [shape = 'u8[1024]{0}', space=vmem, size = 0x400, scoped, tag = 'output window, operand 0, single buffered']
    %10 = vsyncpa [#allocation4], 0
    %11 = vsyncpa [#allocation5], 0
    // Predicated region
    $region2: #{_dqn_forward_impl.1} parent=1 // pred_check
      _
    $region3: #{_dqn_forward_impl.1} parent=1 // pred_check_branch
      %13 = sbr.rel (0) target = $region5
    $region4: #{_dqn_forward_impl.1} parent=1 // pred_region
      _
    $region5: #{_dqn_forward_impl.1} parent=1 // pred_fallthru
      _
    // Predicated region
    $region6: #{_dqn_forward_impl.1} parent=1 // pred_check
      _
    $region7: #{_dqn_forward_impl.1} parent=1 // pred_check_branch
      %15 = sbr.rel (0) target = $region9
    $region8: #{_dqn_forward_impl.1} parent=1 // pred_region
      _
    $region9: #{_dqn_forward_impl.1} parent=1 // pred_fallthru
      _
    // Predicated region
    $region10: #{_dqn_forward_impl.1} parent=1 // pred_check
      _
    $region11: #{_dqn_forward_impl.1} parent=1 // pred_check_branch
      %17 = sbr.rel (0) target = $region13
    $region12: #{_dqn_forward_impl.1} parent=1 // pred_region
      _
    $region13: #{_dqn_forward_impl.1} parent=1 // pred_fallthru
      _
    // Predicated region
    $region14: #{_dqn_forward_impl.1} parent=1 // pred_check
      _
    $region15: #{_dqn_forward_impl.1} parent=1 // pred_check_branch
      %19 = sbr.rel (0) target = $region17
    $region16: #{_dqn_forward_impl.1} parent=1 // pred_region
      %21 = vsyncadd [#allocation4], 0
      %s22 = sshll.u32 %s3, 4
      %s23 = int_to_ptr.hbm [resolvable:$true] %s22
      %s24 = sshll.u32 [#allocation3], 4
      %s25 = int_to_ptr.vmem [resolvable:$true] %s24
      %30 = dma.hbm_to_vmem [thread:$0]  %s23, 1024, %s25, [#allocation4], 64, 64, 4
    $region17: #{_dqn_forward_impl.1} parent=1 // pred_fallthru
      _
    // Predicated region
    $region18: #{_dqn_forward_impl.1} parent=1 // pred_check
      _
    $region19: #{_dqn_forward_impl.1} parent=1 // pred_check_branch
      %32 = sbr.rel (0) target = $region21
    $region20: #{_dqn_forward_impl.1} parent=1 // pred_region
      _
    $region21: #{_dqn_forward_impl.1} parent=1 // pred_fallthru
      _
    // Predicated region
    $region22: #{_dqn_forward_impl.1} parent=1 // pred_check
      _
    $region23: #{_dqn_forward_impl.1} parent=1 // pred_check_branch
      %34 = sbr.rel (0) target = $region25
    $region24: #{_dqn_forward_impl.1} parent=1 // pred_region
      %36 = dma.done [#allocation4], 1024
    $region25: #{_dqn_forward_impl.1} parent=1 // pred_fallthru
      _
    %p38 = scmp.eq.s32.totalorder 0, 0
    // Predicated region
    $region26: #{_dqn_forward_impl.1} parent=1 // pred_check
      %p39 = pneg %p38
    $region27: #{_dqn_forward_impl.1} parent=1 // pred_check_branch
      %41 = sbr.rel (%p39) target = $region29
    $region28: #{_dqn_forward_impl.1} parent=1 // pred_region
      %vm42 = vcmask 254976
      %43 = vst.msk [vmem:[#allocation2] sm:$0x3] %vm42, 0.0
    $region29: #{_dqn_forward_impl.1} parent=1 // pred_fallthru
      _
    %v44 = vld [vmem:[%s0] sm:$0xf]
    %v45 = vld [vmem:[%s0 + $0x4] sm:$0xf]
    %v46 = vld [vmem:[#allocation2] sm:$0x3]
    %v47 = vunpack.c.l.bf16 %v44
    %v48 = vunpack.c.l.bf16 %v45
    %vm49 = vcmask 261120
    %v50 = vsel %vm49, %v47, 0.0
    %v51 = vrot.slane %v50, 4
    %v52 = vadd.f32 %v50, %v51
    %v53 = vrot.slane %v52, 2
    %v54 = vadd.f32 %v52, %v53
    %v55 = vrot.slane %v54, 1
    %v56 = vadd.f32 %v54, %v55
    %v57 = vsel %vm49, %v48, 0.0
    %v58 = vrot.slane %v57, 4
    %v59 = vadd.f32 %v57, %v58
    %v60 = vrot.slane %v59, 2
    %v61 = vadd.f32 %v59, %v60
    %v62 = vrot.slane %v61, 1
    %v63 = vadd.f32 %v61, %v62
    %vm66 = vcmask 1041409
    %v67 = vsel %vm66, %v63, %v56
    %v69 = vadd.f32 %v46, %v67
    %vm70 = vcmask 254976
    %71 = vst.msk [vmem:[#allocation2] sm:$0x3] %vm70, %v69
    // Predicated region
    $region30: #{_dqn_forward_impl.1} parent=1 // pred_check
      %p72 = pneg %p38
    $region31: #{_dqn_forward_impl.1} parent=1 // pred_check_branch
      %74 = sbr.rel (%p72) target = $region33
    $region32: #{_dqn_forward_impl.1} parent=1 // pred_region
      %v75 = vld [vmem:[#allocation2] sm:$0x3]
      %v76 = vmul.f32 %v75, 0.125
      %v77 = vpack.c.bf16 %v76, %v76
      %v78 = vld [vmem:[%s1] sm:$0xf]
      %v79 = vld [vmem:[%s1 + $0x4] sm:$0xf]
      %v80 = vld [vmem:[%s1 + $0x8] sm:$0xf]
      %v81 = vld [vmem:[%s1 + $0xc] sm:$0xf]
      %v82 = vld [vmem:[%s2] sm:$0x1]
      %v84 = vperm.slane %v82, 0
      %v90 = vunpack.c.l.b16 %v78
      %v91 = vunpack.c.l.b16 %v79
      %v92 = vunpack.c.l.b16 %v80
      %v93 = vunpack.c.l.b16 %v81
      %v94 = vpack.c.b16 %v91, %v90
      %v95 = vpack.c.b16 %v93, %v92
      %v99 = vsel %vm49, %v77, 0
      %101 = vmatpush.bf16.msra.mxu0 0
      %102 = vmatpush.bf16.msra.mxu0 0
      %103 = vmatpush.bf16.msra.mxu0 0
      %104 = vmatpush.bf16.msra.mxu0 0
      %105 = vmatpush.bf16.msra.mxu0 0
      %106 = vmatpush.bf16.msra.mxu0 0
      %107 = vmatpush.bf16.msra.mxu0 %v95
      %108 = vmatpush.bf16.msra.mxu0 %v94
      %109 = vmatmul.bf16.gmra.mxu0 %v99
      %v110 = vpop.f32.mrf.mxu0
      %v111 = vadd.f32 %v84, %v110
      %v112 = vpop.f32.mrf.mxu0
      %113 = vdwg.mxu0
      %v114 = vmax.f32 %v111, 0.0
      %v115 = vpack.c.bf16 %v114, %v114
      %v116 = vld [vmem:[#allocation3] sm:$0xf]
      %v117 = vld [vmem:[#allocation3 + $0x4] sm:$0xf]
      %v118 = vld [vmem:[#allocation3 + $0x8] sm:$0xf]
      %v119 = vld [vmem:[#allocation3 + $0xc] sm:$0xf]
      %v120 = vld [vmem:[#allocation3 + $0x10] sm:$0xf]
      %v121 = vld [vmem:[#allocation3 + $0x14] sm:$0xf]
      %v122 = vld [vmem:[#allocation3 + $0x18] sm:$0xf]
      %v123 = vld [vmem:[#allocation3 + $0x1c] sm:$0xf]
      %v124 = vld [vmem:[#allocation3 + $0x20] sm:$0xf]
      %v125 = vld [vmem:[#allocation3 + $0x24] sm:$0xf]
      %v126 = vld [vmem:[#allocation3 + $0x28] sm:$0xf]
      %v127 = vld [vmem:[#allocation3 + $0x2c] sm:$0xf]
      %v128 = vld [vmem:[#allocation3 + $0x30] sm:$0xf]
      %v129 = vld [vmem:[#allocation3 + $0x34] sm:$0xf]
      %v130 = vld [vmem:[#allocation3 + $0x38] sm:$0xf]
      %v131 = vld [vmem:[#allocation3 + $0x3c] sm:$0xf]
      %v132 = vld [vmem:[%s4] sm:$0x1]
      %v134 = vperm.slane %v132, 0
      %v152 = vunpack.c.l.b16 %v116
      %v153 = vunpack.c.l.b16 %v117
      %v154 = vunpack.c.l.b16 %v118
      %v155 = vunpack.c.l.b16 %v119
      %v156 = vunpack.c.l.b16 %v120
      %v157 = vunpack.c.l.b16 %v121
      %v158 = vunpack.c.l.b16 %v122
      %v159 = vunpack.c.l.b16 %v123
      %v160 = vunpack.c.l.b16 %v124
      %v161 = vunpack.c.l.b16 %v125
      %v162 = vunpack.c.l.b16 %v126
      %v163 = vunpack.c.l.b16 %v127
      %v164 = vunpack.c.l.b16 %v128
      %v165 = vunpack.c.l.b16 %v129
      %v166 = vunpack.c.l.b16 %v130
      %v167 = vunpack.c.l.b16 %v131
      %v168 = vpack.c.b16 %v153, %v152
      %v169 = vpack.c.b16 %v155, %v154
      %v170 = vpack.c.b16 %v157, %v156
      %v171 = vpack.c.b16 %v159, %v158
      %v172 = vpack.c.b16 %v161, %v160
      %v173 = vpack.c.b16 %v163, %v162
      %v174 = vpack.c.b16 %v165, %v164
      %v175 = vpack.c.b16 %v167, %v166
      %184 = vmatpush.bf16.msra.mxu0 %v175
      %185 = vmatpush.bf16.msra.mxu0 %v174
      %186 = vmatpush.bf16.msra.mxu0 %v173
      %187 = vmatpush.bf16.msra.mxu0 %v172
      %188 = vmatpush.bf16.msra.mxu0 %v171
      %189 = vmatpush.bf16.msra.mxu0 %v170
      %190 = vmatpush.bf16.msra.mxu0 %v169
      %191 = vmatpush.bf16.msra.mxu0 %v168
      %192 = vmatmul.bf16.gmra.mxu0 %v115
      %v193 = vpop.f32.mrf.mxu0
      %v194 = vadd.f32 %v134, %v193
      %v195 = vpop.f32.mrf.mxu0
      %196 = vdwg.mxu0
      %197 = vst [vmem:[#allocation6] sm:$0x3] %v194
    $region33: #{_dqn_forward_impl.1} parent=1 // pred_fallthru
      _
    // Predicated region
    $region34: #{_dqn_forward_impl.1} parent=1 // pred_check
      _
    $region35: #{_dqn_forward_impl.1} parent=1 // pred_check_branch
      %199 = sbr.rel (0) target = $region37
    $region36: #{_dqn_forward_impl.1} parent=1 // pred_region
      %201 = vsyncadd [#allocation5], 0
      %s203 = sshll.u32 [#allocation6], 4
      %s204 = int_to_ptr.vmem [resolvable:$true] %s203
      %s205 = sshll.u32 %s5, 4
      %s206 = int_to_ptr.hbm [resolvable:$true] %s205
      %208 = dma.vmem_to_hbm [thread:$0]  %s204, 32, %s206, [#allocation5]
    $region37: #{_dqn_forward_impl.1} parent=1 // pred_fallthru
      _
    // Predicated region
    $region38: #{_dqn_forward_impl.1} parent=1 // pred_check
      _
    $region39: #{_dqn_forward_impl.1} parent=1 // pred_check_branch
      %210 = sbr.rel (0) target = $region41
    $region40: #{_dqn_forward_impl.1} parent=1 // pred_region
      %212 = dma.done [#allocation5], 32
    $region41: #{_dqn_forward_impl.1} parent=1 // pred_fallthru
      _
    %213 = vsyncpa [#allocation4], 1
    %214 = vsyncpa [#allocation5], 1

// kernel: _dqn_forward_impl.1
$region0: #{_dqn_forward_impl.1}
  #allocation0 [shape = 'u32[]', space=smem, size = 0x4, offset = 0x4, fixed_abs, tag = 'smem constant byte address 0x4 - core index']
  #allocation1 [shape = 'u32[72,128]{1,0:T(1,128)}', space=vmem, size = 0x9000, scoped, tag = 'internal scratch']
  #allocation2 [shape = 'f32[2,32]{1,0:T(2,128)}', space=vmem, size = 0x400, scoped, tag = 'scratch operand']
  %s0 = inlined_call_operand.vmem [shape: bf16[2,8,32], index: 0, kind: input, shape index: {}]
  %s1 = inlined_call_operand.vmem [shape: bf16[32,128], index: 1, kind: input, shape index: {}]
  %s2 = inlined_call_operand.vmem [shape: f32[1,128], index: 2, kind: input, shape index: {}]
  %s3 = inlined_call_operand.hbm [shape: bf16[128,128], index: 3, kind: input, shape index: {}]
  %s4 = inlined_call_operand.vmem [shape: f32[1,128], index: 4, kind: input, shape index: {}]
  %s5 = inlined_call_operand.hbm [shape: f32[2,128], index: 5, kind: output, shape index: {}]
  %s6 = sld [smem:[#allocation0]]
  $region42: #{_dqn_forward_impl.1} parent=0
    _
  %s8 = ssub.s32 1, %s6
  %s9 = scalar_select 0, %s8, %s6
  $region1: #{_dqn_forward_impl.1} parent=0
    #allocation3 [shape = 'u8[32768]{0}', space=vmem, size = 0x8000, scoped, tag = 'input window, operand 3, single buffered']
    #allocation4 [shape = 's32[1]{0}', space=sflag, size = 0x4, scoped, tag = 'scoped memory for _dqn_forward_impl.1']
    #allocation5 [shape = 's32[1]{0}', space=sflag, size = 0x4, scoped, tag = 'scoped memory for _dqn_forward_impl.1']
    #allocation6 [shape = 'u8[1024]{0}', space=vmem, size = 0x400, scoped, tag = 'output window, operand 0, single buffered']
    %10 = vsyncpa [#allocation4], 0
    %11 = vsyncpa [#allocation5], 0
    // Predicated region
    $region2: #{_dqn_forward_impl.1} parent=1 // pred_check
      _
    $region3: #{_dqn_forward_impl.1} parent=1 // pred_check_branch
      %13 = sbr.rel (0) target = $region5
    $region4: #{_dqn_forward_impl.1} parent=1 // pred_region
      _
    $region5: #{_dqn_forward_impl.1} parent=1 // pred_fallthru
      _
    // Predicated region
    $region6: #{_dqn_forward_impl.1} parent=1 // pred_check
      _
    $region7: #{_dqn_forward_impl.1} parent=1 // pred_check_branch
      %15 = sbr.rel (0) target = $region9
    $region8: #{_dqn_forward_impl.1} parent=1 // pred_region
      _
    $region9: #{_dqn_forward_impl.1} parent=1 // pred_fallthru
      _
    // Predicated region
    $region10: #{_dqn_forward_impl.1} parent=1 // pred_check
      _
    $region11: #{_dqn_forward_impl.1} parent=1 // pred_check_branch
      %17 = sbr.rel (0) target = $region13
    $region12: #{_dqn_forward_impl.1} parent=1 // pred_region
      _
    $region13: #{_dqn_forward_impl.1} parent=1 // pred_fallthru
      _
    // Predicated region
    $region14: #{_dqn_forward_impl.1} parent=1 // pred_check
      _
    $region15: #{_dqn_forward_impl.1} parent=1 // pred_check_branch
      %19 = sbr.rel (0) target = $region17
    $region16: #{_dqn_forward_impl.1} parent=1 // pred_region
      %21 = vsyncadd [#allocation4], 0
      %s22 = sshll.u32 %s3, 4
      %s23 = int_to_ptr.hbm [resolvable:$true] %s22
      %s24 = sshll.u32 [#allocation3], 4
      %s25 = int_to_ptr.vmem [resolvable:$true] %s24
      %30 = dma.hbm_to_vmem [thread:$0]  %s23, 1024, %s25, [#allocation4], 64, 64, 4
    $region17: #{_dqn_forward_impl.1} parent=1 // pred_fallthru
      _
    // Predicated region
    $region18: #{_dqn_forward_impl.1} parent=1 // pred_check
      _
    $region19: #{_dqn_forward_impl.1} parent=1 // pred_check_branch
      %32 = sbr.rel (0) target = $region21
    $region20: #{_dqn_forward_impl.1} parent=1 // pred_region
      _
    $region21: #{_dqn_forward_impl.1} parent=1 // pred_fallthru
      _
    // Predicated region
    $region22: #{_dqn_forward_impl.1} parent=1 // pred_check
      _
    $region23: #{_dqn_forward_impl.1} parent=1 // pred_check_branch
      %34 = sbr.rel (0) target = $region25
    $region24: #{_dqn_forward_impl.1} parent=1 // pred_region
      %36 = dma.done [#allocation4], 1024
    $region25: #{_dqn_forward_impl.1} parent=1 // pred_fallthru
      _
    %p38 = scmp.eq.s32.totalorder 0, 0
    // Predicated region
    $region26: #{_dqn_forward_impl.1} parent=1 // pred_check
      %p39 = pneg %p38
    $region27: #{_dqn_forward_impl.1} parent=1 // pred_check_branch
      %41 = sbr.rel (%p39) target = $region29
    $region28: #{_dqn_forward_impl.1} parent=1 // pred_region
      %vm42 = vcmask 254976
      %43 = vst.msk [vmem:[#allocation2] sm:$0x3] %vm42, 0.0
    $region29: #{_dqn_forward_impl.1} parent=1 // pred_fallthru
      _
    %v44 = vld [vmem:[%s0] sm:$0xf]
    %v45 = vld [vmem:[%s0 + $0x4] sm:$0xf]
    %v46 = vld [vmem:[#allocation2] sm:$0x3]
    %v47 = vunpack.c.l.bf16 %v44
    %v48 = vunpack.c.l.bf16 %v45
    %vm49 = vcmask 261120
    %v50 = vsel %vm49, %v47, 0.0
    %v51 = vrot.slane %v50, 4
    %v52 = vadd.f32 %v50, %v51
    %v53 = vrot.slane %v52, 2
    %v54 = vadd.f32 %v52, %v53
    %v55 = vrot.slane %v54, 1
    %v56 = vadd.f32 %v54, %v55
    %v57 = vsel %vm49, %v48, 0.0
    %v58 = vrot.slane %v57, 4
    %v59 = vadd.f32 %v57, %v58
    %v60 = vrot.slane %v59, 2
    %v61 = vadd.f32 %v59, %v60
    %v62 = vrot.slane %v61, 1
    %v63 = vadd.f32 %v61, %v62
    %vm66 = vcmask 1041409
    %v67 = vsel %vm66, %v63, %v56
    %v69 = vadd.f32 %v46, %v67
    %vm70 = vcmask 254976
    %71 = vst.msk [vmem:[#allocation2] sm:$0x3] %vm70, %v69
    // Predicated region
    $region30: #{_dqn_forward_impl.1} parent=1 // pred_check
      %p72 = pneg %p38
    $region31: #{_dqn_forward_impl.1} parent=1 // pred_check_branch
      %74 = sbr.rel (%p72) target = $region33
    $region32: #{_dqn_forward_impl.1} parent=1 // pred_region
      %v75 = vld [vmem:[#allocation2] sm:$0x3]
      %v76 = vmul.f32 %v75, 0.125
      %v77 = vpack.c.bf16 %v76, %v76
      %v78 = vld [vmem:[%s1] sm:$0xf]
      %v79 = vld [vmem:[%s1 + $0x4] sm:$0xf]
      %v80 = vld [vmem:[%s1 + $0x8] sm:$0xf]
      %v81 = vld [vmem:[%s1 + $0xc] sm:$0xf]
      %v82 = vld [vmem:[%s2] sm:$0x1]
      %v84 = vperm.slane %v82, 0
      %v90 = vunpack.c.l.b16 %v78
      %v91 = vunpack.c.l.b16 %v79
      %v92 = vunpack.c.l.b16 %v80
      %v93 = vunpack.c.l.b16 %v81
      %v94 = vpack.c.b16 %v91, %v90
      %v95 = vpack.c.b16 %v93, %v92
      %v99 = vsel %vm49, %v77, 0
      %101 = vmatpush.bf16.msra.mxu0 0
      %102 = vmatpush.bf16.msra.mxu0 0
      %103 = vmatpush.bf16.msra.mxu0 0
      %104 = vmatpush.bf16.msra.mxu0 0
      %105 = vmatpush.bf16.msra.mxu0 0
      %106 = vmatpush.bf16.msra.mxu0 0
      %107 = vmatpush.bf16.msra.mxu0 %v95
      %108 = vmatpush.bf16.msra.mxu0 %v94
      %109 = vmatmul.bf16.gmra.mxu0 %v99
      %v110 = vpop.f32.mrf.mxu0
      %v111 = vadd.f32 %v84, %v110
      %v112 = vpop.f32.mrf.mxu0
      %113 = vdwg.mxu0
      %v114 = vmax.f32 %v111, 0.0
      %v115 = vpack.c.bf16 %v114, %v114
      %v116 = vld [vmem:[#allocation3] sm:$0xf]
      %v117 = vld [vmem:[#allocation3 + $0x4] sm:$0xf]
      %v118 = vld [vmem:[#allocation3 + $0x8] sm:$0xf]
      %v119 = vld [vmem:[#allocation3 + $0xc] sm:$0xf]
      %v120 = vld [vmem:[#allocation3 + $0x10] sm:$0xf]
      %v121 = vld [vmem:[#allocation3 + $0x14] sm:$0xf]
      %v122 = vld [vmem:[#allocation3 + $0x18] sm:$0xf]
      %v123 = vld [vmem:[#allocation3 + $0x1c] sm:$0xf]
      %v124 = vld [vmem:[#allocation3 + $0x20] sm:$0xf]
      %v125 = vld [vmem:[#allocation3 + $0x24] sm:$0xf]
      %v126 = vld [vmem:[#allocation3 + $0x28] sm:$0xf]
      %v127 = vld [vmem:[#allocation3 + $0x2c] sm:$0xf]
      %v128 = vld [vmem:[#allocation3 + $0x30] sm:$0xf]
      %v129 = vld [vmem:[#allocation3 + $0x34] sm:$0xf]
      %v130 = vld [vmem:[#allocation3 + $0x38] sm:$0xf]
      %v131 = vld [vmem:[#allocation3 + $0x3c] sm:$0xf]
      %v132 = vld [vmem:[%s4] sm:$0x1]
      %v134 = vperm.slane %v132, 0
      %v152 = vunpack.c.l.b16 %v116
      %v153 = vunpack.c.l.b16 %v117
      %v154 = vunpack.c.l.b16 %v118
      %v155 = vunpack.c.l.b16 %v119
      %v156 = vunpack.c.l.b16 %v120
      %v157 = vunpack.c.l.b16 %v121
      %v158 = vunpack.c.l.b16 %v122
      %v159 = vunpack.c.l.b16 %v123
      %v160 = vunpack.c.l.b16 %v124
      %v161 = vunpack.c.l.b16 %v125
      %v162 = vunpack.c.l.b16 %v126
      %v163 = vunpack.c.l.b16 %v127
      %v164 = vunpack.c.l.b16 %v128
      %v165 = vunpack.c.l.b16 %v129
      %v166 = vunpack.c.l.b16 %v130
      %v167 = vunpack.c.l.b16 %v131
      %v168 = vpack.c.b16 %v153, %v152
      %v169 = vpack.c.b16 %v155, %v154
      %v170 = vpack.c.b16 %v157, %v156
      %v171 = vpack.c.b16 %v159, %v158
      %v172 = vpack.c.b16 %v161, %v160
      %v173 = vpack.c.b16 %v163, %v162
      %v174 = vpack.c.b16 %v165, %v164
      %v175 = vpack.c.b16 %v167, %v166
      %184 = vmatpush.bf16.msra.mxu0 %v175
      %185 = vmatpush.bf16.msra.mxu0 %v174
      %186 = vmatpush.bf16.msra.mxu0 %v173
      %187 = vmatpush.bf16.msra.mxu0 %v172
      %188 = vmatpush.bf16.msra.mxu0 %v171
      %189 = vmatpush.bf16.msra.mxu0 %v170
      %190 = vmatpush.bf16.msra.mxu0 %v169
      %191 = vmatpush.bf16.msra.mxu0 %v168
      %192 = vmatmul.bf16.gmra.mxu0 %v115
      %v193 = vpop.f32.mrf.mxu0
      %v194 = vadd.f32 %v134, %v193
      %v195 = vpop.f32.mrf.mxu0
      %196 = vdwg.mxu0
      %197 = vst [vmem:[#allocation6] sm:$0x3] %v194
    $region33: #{_dqn_forward_impl.1} parent=1 // pred_fallthru
      _
    // Predicated region
    $region34: #{_dqn_forward_impl.1} parent=1 // pred_check
      _
    $region35: #{_dqn_forward_impl.1} parent=1 // pred_check_branch
      %199 = sbr.rel (0) target = $region37
    $region36: #{_dqn_forward_impl.1} parent=1 // pred_region
      %201 = vsyncadd [#allocation5], 0
      %s203 = sshll.u32 [#allocation6], 4
      %s204 = int_to_ptr.vmem [resolvable:$true] %s203
      %s205 = sshll.u32 %s5, 4
      %s206 = int_to_ptr.hbm [resolvable:$true] %s205
      %208 = dma.vmem_to_hbm [thread:$0]  %s204, 32, %s206, [#allocation5]
    $region37: #{_dqn_forward_impl.1} parent=1 // pred_fallthru
      _
    // Predicated region
    $region38: #{_dqn_forward_impl.1} parent=1 // pred_check
      _
    $region39: #{_dqn_forward_impl.1} parent=1 // pred_check_branch
      %210 = sbr.rel (0) target = $region41
    $region40: #{_dqn_forward_impl.1} parent=1 // pred_region
      %212 = dma.done [#allocation5], 32
    $region41: #{_dqn_forward_impl.1} parent=1 // pred_fallthru
      _
    %213 = vsyncpa [#allocation4], 1
    %214 = vsyncpa [#allocation5], 1

</llo_original>
